<compile_context>
chip_gen: v5e
topology: v5e:2x2
jax: 0.10.0
libtpu: 0.0.40
codegen_flags: <defaults>
</compile_context>

<pallas_src>
import functools

import jax
import jax.numpy as jnp
import numpy as np
from jax.experimental import pallas as pl
from jax.experimental.pallas import tpu as pltpu

_LANES = 128          # TPU lane width (last dim of the slab)
_SUBLANES = 8         # f32 sublane packing
_BLOCK_ROWS = 2048    # (2048, 128) f32 tile = 1 MiB; 2x(in)+2x(out) buffers ~4 MiB


def _copy_kernel(x_ref, o_ref):
    # Single full-tile load/store: no scratch, no casts, no extra VPU work, so
    # the kernel sits on the HBM roofline even on v5e (single vst slot).
    o_ref[...] = x_ref[...]


@functools.partial(jax.jit, donate_argnums=0)
def pallas_passthrough(x: jax.Array) -> jax.Array:
    """Plumbing demo: lane-dense, aliased pass-through Pallas call.

    NOT part of the GD forward path (which returns None).  `x`'s device buffer
    is donated (consumed); the returned array reuses it where possible.
    """
    orig_shape = x.shape
    n = x.size

    # Flatten and pad to a multiple of 8*128 so the slab is (rows, 128) with
    # rows a multiple of 8 (valid for both the gridless and tiled paths).
    flat = x.reshape(n)
    pad_n = (-n) % (_SUBLANES * _LANES)
    if pad_n:
        flat = jnp.pad(flat, (0, pad_n))
    rows = flat.size // _LANES
    x2 = flat.reshape(rows, _LANES)

    if rows <= _BLOCK_ROWS:
        # Small case (the toy demo input): one gridless whole-array block in
        # VMEM; output aliases the input buffer.
        y2 = pl.pallas_call(
            _copy_kernel,
            out_shape=jax.ShapeDtypeStruct(x2.shape, x2.dtype),
            in_specs=[pl.BlockSpec(memory_space=pltpu.MemorySpace.VMEM)],
            out_specs=pl.BlockSpec(memory_space=pltpu.MemorySpace.VMEM),
            input_output_aliases={0: 0},
            compiler_params=pltpu.CompilerParams(vmem_limit_bytes=32 << 20),
        )(x2)
    else:
        # Non-toy sizes: 1-D grid over rows, double-buffered (2048, 128) tiles,
        # parallel grid axis so v7x can use both TensorCores.
        grid = (pl.cdiv(rows, _BLOCK_ROWS),)
        y2 = pl.pallas_call(
            _copy_kernel,
            out_shape=jax.ShapeDtypeStruct(x2.shape, x2.dtype),
            grid=grid,
            in_specs=[pl.BlockSpec((_BLOCK_ROWS, _LANES), lambda i: (i, 0))],
            out_specs=pl.BlockSpec((_BLOCK_ROWS, _LANES), lambda i: (i, 0)),
            input_output_aliases={0: 0},
            compiler_params=pltpu.CompilerParams(
                dimension_semantics=("parallel",),
                vmem_limit_bytes=32 << 20,
            ),
        )(x2)

    y_flat = y2.reshape(-1)
    if pad_n:
        y_flat = y_flat[:n]
    return y_flat.reshape(orig_shape)


def gd_forward(x):
    """Exact semantic equivalent of GD.forward: body is `pass` -> returns None.

    No Pallas call, no DMA, no dispatch — the module performs no computation,
    so the hot path launches nothing.
    """
    return None


if __name__ == "__main__":
    key = jax.random.PRNGKey(0)
    k1, k2, k3 = jax.random.split(key, 3)

    # ---- 1) Faithful forward: returns None, like the PyTorch module. --------
    x = jax.random.normal(k1, (2, 4, 16, 16), dtype=jnp.float32)
    # Snapshot to host BEFORE the donating pallas call below.
    x_host = np.asarray(jax.device_get(x))
    out = gd_forward(x)
    assert out is None

    # ---- 2) Plumbing demo: small gridless/aliased path. ----------------------
    y = pallas_passthrough(x)          # consumes x's buffer
    jax.block_until_ready(y)
    assert y.shape == x_host.shape and y.dtype == x_host.dtype
    assert np.array_equal(np.asarray(jax.device_get(y)), x_host)

    # ---- 3) Plumbing demo: padding path (size not a multiple of 128). --------
    xp = jax.random.normal(k2, (3, 5, 7, 11), dtype=jnp.float32)
    xp_host = np.asarray(jax.device_get(xp))
    yp = pallas_passthrough(xp)
    jax.block_until_ready(yp)
    assert np.array_equal(np.asarray(jax.device_get(yp)), xp_host)

    # ---- 4) Plumbing demo: tiled grid path (rows > _BLOCK_ROWS). --------------
    xb = jax.random.normal(k3, (8192, 128), dtype=jnp.float32)
    xb_host = np.asarray(jax.device_get(xb))
    yb = pallas_passthrough(xb)
    jax.block_until_ready(yb)
    assert np.array_equal(np.asarray(jax.device_get(yb)), xb_host)

    print("KERNEL_OK")
</pallas_src>

<mosaic_0001>
module attributes {stable_mosaic.version = 11 : i64} {
  func.func @_copy_kernel(%arg0: memref<16x128xf32, #tpu.memory_space<vmem>>, %arg1: memref<16x128xf32, #tpu.memory_space<vmem>>) attributes {dimension_semantics = [], scalar_prefetch = 0 : i64, scratch_operands = 0 : i64, tpu.core_type = #tpu.core_type<tc>} {
    %c0 = arith.constant 0 : index
    %c0_0 = arith.constant 0 : index
    %0 = vector.load %arg0[%c0, %c0_0] : memref<16x128xf32, #tpu.memory_space<vmem>>, vector<16x128xf32>
    %c0_1 = arith.constant 0 : index
    %c0_2 = arith.constant 0 : index
    %1 = vector.load %arg1[%c0_1, %c0_2] : memref<16x128xf32, #tpu.memory_space<vmem>>, vector<16x128xf32>
    tpu.vector_store %arg1[%c0_1, %c0_2], %0 {strides = array<i32>} : memref<16x128xf32, #tpu.memory_space<vmem>>, vector<16x128xf32>,
    return
  }
}

</mosaic_0001>

<llo_original>
// kernel: pallas_passthrough.1
$region0: #{pallas_passthrough.1}
  #allocation0 [shape = 'u32[]', space=smem, size = 0x4, offset = 0x4, fixed_abs, tag = 'smem constant byte address 0x4 - core index']
  #allocation1 [shape = 'u32[72,128]{1,0:T(1,128)}', space=vmem, size = 0x9000, scoped, tag = 'internal scratch']
  %s0 = inlined_call_operand.vmem [shape: f32[16,128], index: 0, kind: input, shape index: {}, may-alias: {0,1}]
  %s1 = inlined_call_operand.vmem [shape: f32[16,128], index: 1, kind: output, shape index: {}, may-alias: {0,1}]
  %s2 = sld [smem:[#allocation0]]
  $region14: #{pallas_passthrough.1} parent=0
    _
  %s4 = ssub.s32 1, %s2
  %s5 = scalar_select 0, %s4, %s2
  // Predicated region
  $region2: #{pallas_passthrough.1} parent=0 // pred_check
    _
  $region3: #{pallas_passthrough.1} parent=0 // pred_check_branch
    %7 = sbr.rel (0) target = $region5
  $region4: #{pallas_passthrough.1} parent=0 // pred_region
    _
  $region5: #{pallas_passthrough.1} parent=0 // pred_fallthru
    _
  %v8 = vld [vmem:[%s0] sm:$0xff]
  %v9 = vld [vmem:[%s0 + $0x8] sm:$0xff]
  %10 = vst [vmem:[%s1] sm:$0xff] %v8
  %11 = vst [vmem:[%s1 + $0x8] sm:$0xff] %v9
  // Predicated region
  $region6: #{pallas_passthrough.1} parent=0 // pred_check
    _
  $region7: #{pallas_passthrough.1} parent=0 // pred_check_branch
    %13 = sbr.rel (0) target = $region9
  $region8: #{pallas_passthrough.1} parent=0 // pred_region
    _
  $region9: #{pallas_passthrough.1} parent=0 // pred_fallthru
    _
  // Predicated region
  $region10: #{pallas_passthrough.1} parent=0 // pred_check
    _
  $region11: #{pallas_passthrough.1} parent=0 // pred_check_branch
    %15 = sbr.rel (0) target = $region13
  $region12: #{pallas_passthrough.1} parent=0 // pred_region
    _
  $region13: #{pallas_passthrough.1} parent=0 // pred_fallthru
    _

</llo_original>
